<compile_context>
chip_gen: v7x
topology: tpu7x:2x2x1
jax: 0.10.0
libtpu: 0.0.40
codegen_flags: <defaults>
</compile_context>

<pallas_src>
import jax
import jax.numpy as jnp
from jax.experimental import pallas as pl
from jax.experimental.pallas import tpu as pltpu


def _round_up(x, m):
    return ((x + m - 1) // m) * m


def _mlp_kernel(x_ref, w1_ref, b1_ref, w2_ref, b2_ref, o_ref, acc_ref):
    """One (batch-tile, K-tile) grid step of relu(x @ W1 + b1) @ W2 + b2."""
    k = pl.program_id(1)

    @pl.when(k == 0)
    def _():
        acc_ref[...] = jnp.zeros_like(acc_ref)

    # Accumulate the first matmul over the d_in (K) grid axis in f32 on the MXU.
    acc_ref[...] += jnp.dot(
        x_ref[...], w1_ref[...], preferred_element_type=jnp.float32
    )

    @pl.when(k == pl.num_programs(1) - 1)
    def _():
        # Epilogue (once per batch tile): bias + ReLU, Dropout(0.3) == identity
        # at inference, second matmul, bias, lane-dense store.
        h = jnp.maximum(acc_ref[...] + b1_ref[...], 0.0)
        out = jnp.dot(
            h.astype(w2_ref.dtype), w2_ref[...], preferred_element_type=jnp.float32
        ) + b2_ref[...]
        o_ref[...] = out.astype(o_ref.dtype)


def toxic_classifier_forward(x, w1, b1, w2, b2, *, block_b=256, block_k=256):
    """Fused forward pass of ToxicClassifier as one Pallas kernel.

    x:  (B, input_dim)        w1: (input_dim, 512)   b1: (1, 512)
    w2: (512, output_dim)     b2: (1, output_dim)
    returns (B, output_dim) f32
    """
    B, d_in = x.shape
    hidden = w1.shape[1]
    d_out = w2.shape[1]
    assert w1.shape[0] == d_in and w2.shape[0] == hidden
    assert hidden % 128 == 0, "hidden width must be a multiple of 128 (module uses 512)"

    # ---- tiling / padding decisions (wrapper-side layout plumbing) ----
    tb = min(block_b, _round_up(B, 8))        # batch tile: >=8 rows, up to 256
    b_pad = _round_up(B, tb)
    tk = min(block_k, _round_up(d_in, 128))   # K tile: >=128, up to 256
    k_pad = _round_up(d_in, tk)
    n_pad = _round_up(d_out, 128)             # lane-dense output width

    # bf16 activations/weights (zero-padded), f32 biases. Zero padding is exact:
    # padded K columns/rows contribute 0 to the matmul; padded N columns are
    # sliced off below.
    xp = jnp.zeros((b_pad, k_pad), jnp.bfloat16).at[:B, :d_in].set(
        x.astype(jnp.bfloat16))
    w1p = jnp.zeros((k_pad, hidden), jnp.bfloat16).at[:d_in, :].set(
        w1.astype(jnp.bfloat16))
    w2p = jnp.zeros((hidden, n_pad), jnp.bfloat16).at[:, :d_out].set(
        w2.astype(jnp.bfloat16))
    b1p = b1.reshape(1, hidden).astype(jnp.float32)
    b2p = jnp.zeros((1, n_pad), jnp.float32).at[:, :d_out].set(
        b2.reshape(1, d_out).astype(jnp.float32))

    grid = (b_pad // tb, k_pad // tk)

    flops = 2 * b_pad * (k_pad * hidden + hidden * n_pad)
    bytes_accessed = (xp.size * 2 + w1p.size * 2 + w2p.size * 2
                      + b1p.size * 4 + b2p.size * 4 + b_pad * n_pad * 4)

    out_padded = pl.pallas_call(
        _mlp_kernel,
        out_shape=jax.ShapeDtypeStruct((b_pad, n_pad), jnp.float32),
        grid_spec=pltpu.PrefetchScalarGridSpec(
            num_scalar_prefetch=0,
            grid=grid,
            in_specs=[
                pl.BlockSpec((tb, tk), lambda i, k: (i, k)),         # x tile
                pl.BlockSpec((tk, hidden), lambda i, k: (k, 0)),     # W1 K-slab
                pl.BlockSpec((1, hidden), lambda i, k: (0, 0)),      # b1 (VMEM-resident)
                pl.BlockSpec((hidden, n_pad), lambda i, k: (0, 0)),  # W2 (VMEM-resident)
                pl.BlockSpec((1, n_pad), lambda i, k: (0, 0)),       # b2 (VMEM-resident)
            ],
            out_specs=pl.BlockSpec((tb, n_pad), lambda i, k: (i, 0)),
            scratch_shapes=[pltpu.VMEM((tb, hidden), jnp.float32)],  # f32 accumulator
        ),
        compiler_params=pltpu.CompilerParams(
            # batch tiles independent -> parallel (2 TCs on v7x); K reduction last.
            dimension_semantics=("parallel", "arbitrary"),
        ),
        cost_estimate=pl.CostEstimate(
            flops=flops, bytes_accessed=bytes_accessed, transcendentals=0),
    )(xp, w1p, b1p, w2p, b2p)

    return out_padded[:B, :d_out]


if __name__ == "__main__":
    # Small, deterministic shapes consistent with the module's forward:
    # batch=8, input_dim=32, hidden=512 (fixed by module), output_dim=8.
    B, INPUT_DIM, HIDDEN, OUTPUT_DIM = 8, 32, 512, 8

    key = jax.random.PRNGKey(0)
    kx, kw1, kb1, kw2, kb2 = jax.random.split(key, 5)

    x = jax.random.normal(kx, (B, INPUT_DIM), dtype=jnp.float32)
    # Deterministic parameter init (scaled normals; synthetic, not a checkpoint).
    w1 = jax.random.normal(kw1, (INPUT_DIM, HIDDEN), dtype=jnp.float32) * 0.05
    b1 = jax.random.normal(kb1, (1, HIDDEN), dtype=jnp.float32) * 0.01
    w2 = jax.random.normal(kw2, (HIDDEN, OUTPUT_DIM), dtype=jnp.float32) * 0.05
    b2 = jax.random.normal(kb2, (1, OUTPUT_DIM), dtype=jnp.float32) * 0.01

    out = jax.block_until_ready(toxic_classifier_forward(x, w1, b1, w2, b2))

    # Reference with the same bf16 activation/weight casting as the kernel
    # (f32 accumulation, f32 biases), so tolerances stay tight.
    xb, w1b, w2b = (a.astype(jnp.bfloat16) for a in (x, w1, w2))
    h_ref = jnp.maximum(jnp.dot(xb, w1b, preferred_element_type=jnp.float32) + b1, 0.0)
    ref = jnp.dot(h_ref.astype(jnp.bfloat16), w2b,
                  preferred_element_type=jnp.float32) + b2

    assert out.shape == (B, OUTPUT_DIM), out.shape
    assert jnp.allclose(out, ref, atol=1e-2, rtol=1e-2), "mismatch vs reference"

    print("KERNEL_OK")
</pallas_src>

<mosaic_0001>
module attributes {stable_mosaic.version = 11 : i64} {
  func.func @_mlp_kernel(%arg0: i32, %arg1: i32, %arg2: memref<8x128xbf16, #tpu.memory_space<vmem>>, %arg3: memref<128x512xbf16, #tpu.memory_space<vmem>>, %arg4: memref<1x512xf32, #tpu.memory_space<vmem>>, %arg5: memref<512x128xbf16, #tpu.memory_space<vmem>>, %arg6: memref<1x128xf32, #tpu.memory_space<vmem>>, %arg7: memref<8x128xf32, #tpu.memory_space<vmem>>, %arg8: memref<8x512xf32, #tpu.memory_space<vmem>>) attributes {dimension_semantics = [#tpu.dimension_semantics<parallel>, #tpu.dimension_semantics<arbitrary>], iteration_bounds = array<i64: 1, 1>, scalar_prefetch = 0 : i64, scratch_operands = 1 : i64, tpu.core_type = #tpu.core_type<tc>, window_params = [{transform_indices = @transform_0, window_bounds = array<i64: 8, 128>}, {transform_indices = @transform_1, window_bounds = array<i64: 128, 512>}, {pipeline_mode = #tpu.pipeline_mode<synchronous>, transform_indices = @transform_2, window_bounds = array<i64: 1, 512>}, {pipeline_mode = #tpu.pipeline_mode<synchronous>, transform_indices = @transform_3, window_bounds = array<i64: 512, 128>}, {pipeline_mode = #tpu.pipeline_mode<synchronous>, transform_indices = @transform_4, window_bounds = array<i64: 1, 128>}, {transform_indices = @transform_5, window_bounds = array<i64: 8, 128>}]} {
    %c0_i32 = arith.constant 0 : i32
    %0 = arith.cmpi eq, %arg1, %c0_i32 : i32
    %1 = arith.extui %0 : i1 to i32
    %c0_i32_0 = arith.constant 0 : i32
    %2 = arith.cmpi ne, %1, %c0_i32_0 : i32
    scf.if %2 {
      %cst_10 = arith.constant 0.000000e+00 : f32
      %12 = vector.broadcast %cst_10 : f32 to vector<8x512xf32>
      %c0_11 = arith.constant 0 : index
      %c0_12 = arith.constant 0 : index
      %13 = vector.load %arg8[%c0_11, %c0_12] : memref<8x512xf32, #tpu.memory_space<vmem>>, vector<8x512xf32>
      tpu.vector_store %arg8[%c0_11, %c0_12], %12 {strides = array<i32>} : memref<8x512xf32, #tpu.memory_space<vmem>>, vector<8x512xf32>,
    } else {
    }
    %c0 = arith.constant 0 : index
    %c0_1 = arith.constant 0 : index
    %3 = vector.load %arg8[%c0, %c0_1] : memref<8x512xf32, #tpu.memory_space<vmem>>, vector<8x512xf32>
    %c0_2 = arith.constant 0 : index
    %c0_3 = arith.constant 0 : index
    %4 = vector.load %arg2[%c0_2, %c0_3] : memref<8x128xbf16, #tpu.memory_space<vmem>>, vector<8x128xbf16>
    %c0_4 = arith.constant 0 : index
    %c0_5 = arith.constant 0 : index
    %5 = vector.load %arg3[%c0_4, %c0_5] : memref<128x512xbf16, #tpu.memory_space<vmem>>, vector<128x512xbf16>
    %cst = arith.constant dense<0.000000e+00> : vector<8x512xf32>
    %6 = tpu.matmul %4, %5, %cst {dimension_numbers = #tpu.dot_dimension_numbers<[1], [0], [0], [1], [0, 0, 1, 1], [], []>} : vector<8x128xbf16>, vector<128x512xbf16>, vector<8x512xf32> -> vector<8x512xf32>
    %7 = arith.addf %3, %6 : vector<8x512xf32>
    %c0_6 = arith.constant 0 : index
    %c0_7 = arith.constant 0 : index
    %8 = vector.load %arg8[%c0_6, %c0_7] : memref<8x512xf32, #tpu.memory_space<vmem>>, vector<8x512xf32>
    tpu.vector_store %arg8[%c0_6, %c0_7], %7 {strides = array<i32>} : memref<8x512xf32, #tpu.memory_space<vmem>>, vector<8x512xf32>,
    %c0_i32_8 = arith.constant 0 : i32
    %9 = arith.cmpi eq, %arg1, %c0_i32_8 : i32
    %10 = arith.extui %9 : i1 to i32
    %c0_i32_9 = arith.constant 0 : i32
    %11 = arith.cmpi ne, %10, %c0_i32_9 : i32
    scf.if %11 {
      %c0_10 = arith.constant 0 : index
      %c0_11 = arith.constant 0 : index
      %12 = vector.load %arg8[%c0_10, %c0_11] : memref<8x512xf32, #tpu.memory_space<vmem>>, vector<8x512xf32>
      %c0_12 = arith.constant 0 : index
      %c0_13 = arith.constant 0 : index
      %13 = vector.load %arg4[%c0_12, %c0_13] : memref<1x512xf32, #tpu.memory_space<vmem>>, vector<1x512xf32>
      %14 = vector.broadcast %13 : vector<1x512xf32> to vector<8x512xf32>
      %15 = arith.addf %12, %14 : vector<8x512xf32>
      %cst_14 = arith.constant 0.000000e+00 : f32
      %16 = vector.broadcast %cst_14 : f32 to vector<8x512xf32>
      %17 = arith.maximumf %15, %16 : vector<8x512xf32>
      %18 = arith.truncf %17 : vector<8x512xf32> to vector<8x512xbf16>
      %c0_15 = arith.constant 0 : index
      %c0_16 = arith.constant 0 : index
      %19 = vector.load %arg5[%c0_15, %c0_16] : memref<512x128xbf16, #tpu.memory_space<vmem>>, vector<512x128xbf16>
      %cst_17 = arith.constant dense<0.000000e+00> : vector<8x128xf32>
      %20 = tpu.matmul %18, %19, %cst_17 {dimension_numbers = #tpu.dot_dimension_numbers<[1], [0], [0], [1], [0, 0, 1, 1], [], []>} : vector<8x512xbf16>, vector<512x128xbf16>, vector<8x128xf32> -> vector<8x128xf32>
      %c0_18 = arith.constant 0 : index
      %c0_19 = arith.constant 0 : index
      %21 = vector.load %arg6[%c0_18, %c0_19] : memref<1x128xf32, #tpu.memory_space<vmem>>, vector<1x128xf32>
      %22 = vector.broadcast %21 : vector<1x128xf32> to vector<8x128xf32>
      %23 = arith.addf %20, %22 : vector<8x128xf32>
      %c0_20 = arith.constant 0 : index
      %c0_21 = arith.constant 0 : index
      %24 = vector.load %arg7[%c0_20, %c0_21] : memref<8x128xf32, #tpu.memory_space<vmem>>, vector<8x128xf32>
      tpu.vector_store %arg7[%c0_20, %c0_21], %23 {strides = array<i32>} : memref<8x128xf32, #tpu.memory_space<vmem>>, vector<8x128xf32>,
    } else {
    }
    return
  }
  func.func @transform_0(%arg0: i32, %arg1: i32) -> (i32, i32) {
    %c0_i32 = arith.constant 0 : i32
    return %arg0, %arg1 : i32, i32
  }
  func.func @transform_1(%arg0: i32, %arg1: i32) -> (i32, i32) {
    %c0_i32 = arith.constant 0 : i32
    %c0_i32_0 = arith.constant 0 : i32
    return %arg1, %c0_i32 : i32, i32
  }
  func.func @transform_2(%arg0: i32, %arg1: i32) -> (i32, i32) {
    %c0_i32 = arith.constant 0 : i32
    %c0_i32_0 = arith.constant 0 : i32
    %c0_i32_1 = arith.constant 0 : i32
    return %c0_i32, %c0_i32_0 : i32, i32
  }
  func.func @transform_3(%arg0: i32, %arg1: i32) -> (i32, i32) {
    %c0_i32 = arith.constant 0 : i32
    %c0_i32_0 = arith.constant 0 : i32
    %c0_i32_1 = arith.constant 0 : i32
    return %c0_i32, %c0_i32_0 : i32, i32
  }
  func.func @transform_4(%arg0: i32, %arg1: i32) -> (i32, i32) {
    %c0_i32 = arith.constant 0 : i32
    %c0_i32_0 = arith.constant 0 : i32
    %c0_i32_1 = arith.constant 0 : i32
    return %c0_i32, %c0_i32_0 : i32, i32
  }
  func.func @transform_5(%arg0: i32, %arg1: i32) -> (i32, i32) {
    %c0_i32 = arith.constant 0 : i32
    %c0_i32_0 = arith.constant 0 : i32
    return %arg0, %c0_i32 : i32, i32
  }
}

</mosaic_0001>

<llo_original>
// kernel: tpu_custom_call.1
$region0: #{tpu_custom_call.1}
  #allocation0 [shape = 'u32[]', space=smem, size = 0x4, offset = 0x4, fixed_abs, tag = 'smem constant byte address 0x4 - core index']
  #allocation1 [shape = 'u32[144,128]{1,0:T(1,128)}', space=vmem, size = 0x12000, scoped, tag = 'internal scratch']
  #allocation2 [shape = 'f32[8,512]{1,0:T(8,128)}', space=vmem, size = 0x4000, scoped, tag = 'scratch operand']
  %s0 = inlined_call_operand.hbm [shape: bf16[8,128], index: 0, kind: input, shape index: {}]
  %s1 = inlined_call_operand.hbm [shape: bf16[128,512], index: 1, kind: input, shape index: {}]
  %s2 = inlined_call_operand.vmem [shape: f32[1,512], index: 2, kind: input, shape index: {}]
  %s3 = inlined_call_operand.hbm [shape: bf16[512,128], index: 3, kind: input, shape index: {}]
  %s4 = inlined_call_operand.vmem [shape: f32[1,128], index: 4, kind: input, shape index: {}]
  %s5 = inlined_call_operand.hbm [shape: f32[8,128], index: 5, kind: output, shape index: {}]
  %s6 = sld [smem:[#allocation0]]
  $region50: #{tpu_custom_call.1} parent=0
    _
  %s8 = ssub.s32 1, %s6
  %s9 = scalar_select 0, %s8, %s6
  $region1: #{tpu_custom_call.1} parent=0
    #allocation3 [shape = 'u8[2048]{0}', space=vmem, size = 0x800, scoped, tag = 'input window, operand 0, single buffered']
    #allocation4 [shape = 's32[1]{0}', space=sflag, size = 0x4, scoped, tag = 'scoped memory for tpu_custom_call.1']
    #allocation5 [shape = 's32[1]{0}', space=sflag, size = 0x4, scoped, tag = 'scoped memory for tpu_custom_call.1']
    #allocation6 [shape = 'u8[131072]{0}', space=vmem, size = 0x20000, scoped, tag = 'input window, operand 1, single buffered']
    #allocation7 [shape = 's32[1]{0}', space=sflag, size = 0x4, scoped, tag = 'scoped memory for tpu_custom_call.1']
    #allocation8 [shape = 'u8[131072]{0}', space=vmem, size = 0x20000, scoped, tag = 'input window, operand 3, single buffered']
    #allocation9 [shape = 'u8[4096]{0}', space=vmem, size = 0x1000, scoped, tag = 'output window, operand 0, single buffered']
    %10 = vsyncpa [#allocation4], 0
    %11 = vsyncpa [#allocation7], 0
    %12 = vsyncpa [#allocation5], 0
    // Predicated region
    $region2: #{tpu_custom_call.1} parent=1 // pred_check
      _
    $region3: #{tpu_custom_call.1} parent=1 // pred_check_branch
      %14 = sbr.rel (0) target = $region5
    $region4: #{tpu_custom_call.1} parent=1 // pred_region
      %s16 = ssub.s32 64, 64
      %17 = vsyncadd [#allocation4], %s16
      %s19 = sshll.u32 [#allocation3], 4
      %s20 = int_to_ptr.vmem [resolvable:$true] %s19
      %22 = dma.hbm_to_vmem [thread:$0]  %s0, 64, %s20, [#allocation4]
    $region5: #{tpu_custom_call.1} parent=1 // pred_fallthru
      _
    // Predicated region
    $region6: #{tpu_custom_call.1} parent=1 // pred_check
      _
    $region7: #{tpu_custom_call.1} parent=1 // pred_check_branch
      %24 = sbr.rel (0) target = $region9
    $region8: #{tpu_custom_call.1} parent=1 // pred_region
      %s26 = ssub.s32 4096, 4096
      %27 = vsyncadd [#allocation7], %s26
      %s28 = sshll.u32 [#allocation6], 4
      %s29 = int_to_ptr.vmem [resolvable:$true] %s28
      %34 = dma.hbm_to_vmem [thread:$0]  %s1, 4096, %s29, [#allocation7], 256, 256, 16
    $region9: #{tpu_custom_call.1} parent=1 // pred_fallthru
      _
    // Predicated region
    $region10: #{tpu_custom_call.1} parent=1 // pred_check
      _
    $region11: #{tpu_custom_call.1} parent=1 // pred_check_branch
      %36 = sbr.rel (0) target = $region13
    $region12: #{tpu_custom_call.1} parent=1 // pred_region
      _
    $region13: #{tpu_custom_call.1} parent=1 // pred_fallthru
      _
    // Predicated region
    $region14: #{tpu_custom_call.1} parent=1 // pred_check
      _
    $region15: #{tpu_custom_call.1} parent=1 // pred_check_branch
      %38 = sbr.rel (0) target = $region17
    $region16: #{tpu_custom_call.1} parent=1 // pred_region
      %s40 = ssub.s32 4096, 4096
      %41 = vsyncadd [#allocation7], %s40
      %s42 = sshll.u32 [#allocation8], 4
      %s43 = int_to_ptr.vmem [resolvable:$true] %s42
      %48 = dma.hbm_to_vmem [thread:$0]  %s3, 4096, %s43, [#allocation7], 64, 64, 4
    $region17: #{tpu_custom_call.1} parent=1 // pred_fallthru
      _
    // Predicated region
    $region18: #{tpu_custom_call.1} parent=1 // pred_check
      _
    $region19: #{tpu_custom_call.1} parent=1 // pred_check_branch
      %50 = sbr.rel (0) target = $region21
    $region20: #{tpu_custom_call.1} parent=1 // pred_region
      _
    $region21: #{tpu_custom_call.1} parent=1 // pred_fallthru
      _
    // Predicated region
    $region22: #{tpu_custom_call.1} parent=1 // pred_check
      _
    $region23: #{tpu_custom_call.1} parent=1 // pred_check_branch
      %52 = sbr.rel (0) target = $region25
    $region24: #{tpu_custom_call.1} parent=1 // pred_region
      %53 = dma.done [#allocation4], 64
    $region25: #{tpu_custom_call.1} parent=1 // pred_fallthru
      _
    // Predicated region
    $region26: #{tpu_custom_call.1} parent=1 // pred_check
      _
    $region27: #{tpu_custom_call.1} parent=1 // pred_check_branch
      %55 = sbr.rel (0) target = $region29
    $region28: #{tpu_custom_call.1} parent=1 // pred_region
      %56 = dma.done [#allocation7], 4096
    $region29: #{tpu_custom_call.1} parent=1 // pred_fallthru
      _
    // Predicated region
    $region30: #{tpu_custom_call.1} parent=1 // pred_check
      _
    $region31: #{tpu_custom_call.1} parent=1 // pred_check_branch
      %58 = sbr.rel (0) target = $region33
    $region32: #{tpu_custom_call.1} parent=1 // pred_region
      %59 = dma.done [#allocation7], 4096
    $region33: #{tpu_custom_call.1} parent=1 // pred_fallthru
      _
    %p61 = scmp.eq.s32.totalorder 0, 0
    // Predicated region
    $region34: #{tpu_custom_call.1} parent=1 // pred_check
      %p62 = pneg %p61
    $region35: #{tpu_custom_call.1} parent=1 // pred_check_branch
      %64 = sbr.rel (%p62) target = $region37
    $region36: #{tpu_custom_call.1} parent=1 // pred_region
      %65 = vst [vmem:[#allocation2] sm:$0xff] 0.0
      %66 = vst [vmem:[#allocation2 + $0x8] sm:$0xff] 0.0
      %67 = vst [vmem:[#allocation2 + $0x10] sm:$0xff] 0.0
      %68 = vst [vmem:[#allocation2 + $0x18] sm:$0xff] 0.0
    $region37: #{tpu_custom_call.1} parent=1 // pred_fallthru
      _
    %v69 = vld [vmem:[#allocation2] sm:$0xff]
    %v70 = vld [vmem:[#allocation2 + $0x8] sm:$0xff]
    %v71 = vld [vmem:[#allocation2 + $0x10] sm:$0xff]
    %v72 = vld [vmem:[#allocation2 + $0x18] sm:$0xff]
    %v73 = vld [vmem:[#allocation3] sm:$0xf]
    %v74 = vld [vmem:[#allocation6] sm:$0xff]
    %v75 = vld [vmem:[#allocation6 + $0x8] sm:$0xff]
    %v76 = vld [vmem:[#allocation6 + $0x10] sm:$0xff]
    %v77 = vld [vmem:[#allocation6 + $0x18] sm:$0xff]
    %v78 = vld [vmem:[#allocation6 + $0x20] sm:$0xff]
    %v79 = vld [vmem:[#allocation6 + $0x28] sm:$0xff]
    %v80 = vld [vmem:[#allocation6 + $0x30] sm:$0xff]
    %v81 = vld [vmem:[#allocation6 + $0x38] sm:$0xff]
    %v82 = vld [vmem:[#allocation6 + $0x40] sm:$0xff]
    %v83 = vld [vmem:[#allocation6 + $0x48] sm:$0xff]
    %v84 = vld [vmem:[#allocation6 + $0x50] sm:$0xff]
    %v85 = vld [vmem:[#allocation6 + $0x58] sm:$0xff]
    %v86 = vld [vmem:[#allocation6 + $0x60] sm:$0xff]
    %v87 = vld [vmem:[#allocation6 + $0x68] sm:$0xff]
    %v88 = vld [vmem:[#allocation6 + $0x70] sm:$0xff]
    %v89 = vld [vmem:[#allocation6 + $0x78] sm:$0xff]
    %v90 = vld [vmem:[#allocation6 + $0x80] sm:$0xff]
    %v91 = vld [vmem:[#allocation6 + $0x88] sm:$0xff]
    %v92 = vld [vmem:[#allocation6 + $0x90] sm:$0xff]
    %v93 = vld [vmem:[#allocation6 + $0x98] sm:$0xff]
    %v94 = vld [vmem:[#allocation6 + $0xa0] sm:$0xff]
    %v95 = vld [vmem:[#allocation6 + $0xa8] sm:$0xff]
    %v96 = vld [vmem:[#allocation6 + $0xb0] sm:$0xff]
    %v97 = vld [vmem:[#allocation6 + $0xb8] sm:$0xff]
    %v98 = vld [vmem:[#allocation6 + $0xc0] sm:$0xff]
    %v99 = vld [vmem:[#allocation6 + $0xc8] sm:$0xff]
    %v100 = vld [vmem:[#allocation6 + $0xd0] sm:$0xff]
    %v101 = vld [vmem:[#allocation6 + $0xd8] sm:$0xff]
    %v102 = vld [vmem:[#allocation6 + $0xe0] sm:$0xff]
    %v103 = vld [vmem:[#allocation6 + $0xe8] sm:$0xff]
    %v104 = vld [vmem:[#allocation6 + $0xf0] sm:$0xff]
    %v105 = vld [vmem:[#allocation6 + $0xf8] sm:$0xff]
    %v138 = vunpack.c.l.b16 %v74
    %v139 = vunpack.c.h.b16 %v74
    %v140 = vunpack.c.l.b16 %v75
    %v141 = vunpack.c.h.b16 %v75
    %v142 = vunpack.c.l.b16 %v76
    %v143 = vunpack.c.h.b16 %v76
    %v144 = vunpack.c.l.b16 %v77
    %v145 = vunpack.c.h.b16 %v77
    %v146 = vunpack.c.l.b16 %v78
    %v147 = vunpack.c.h.b16 %v78
    %v148 = vunpack.c.l.b16 %v79
    %v149 = vunpack.c.h.b16 %v79
    %v150 = vunpack.c.l.b16 %v80
    %v151 = vunpack.c.h.b16 %v80
    %v152 = vunpack.c.l.b16 %v81
    %v153 = vunpack.c.h.b16 %v81
    %v154 = vunpack.c.l.b16 %v82
    %v155 = vunpack.c.h.b16 %v82
    %v156 = vunpack.c.l.b16 %v83
    %v157 = vunpack.c.h.b16 %v83
    %v158 = vunpack.c.l.b16 %v84
    %v159 = vunpack.c.h.b16 %v84
    %v160 = vunpack.c.l.b16 %v85
    %v161 = vunpack.c.h.b16 %v85
    %v162 = vunpack.c.l.b16 %v86
    %v163 = vunpack.c.h.b16 %v86
    %v164 = vunpack.c.l.b16 %v87
    %v165 = vunpack.c.h.b16 %v87
    %v166 = vunpack.c.l.b16 %v88
    %v167 = vunpack.c.h.b16 %v88
    %v168 = vunpack.c.l.b16 %v89
    %v169 = vunpack.c.h.b16 %v89
    %v170 = vunpack.c.l.b16 %v90
    %v171 = vunpack.c.h.b16 %v90
    %v172 = vunpack.c.l.b16 %v91
    %v173 = vunpack.c.h.b16 %v91
    %v174 = vunpack.c.l.b16 %v92
    %v175 = vunpack.c.h.b16 %v92
    %v176 = vunpack.c.l.b16 %v93
    %v177 = vunpack.c.h.b16 %v93
    %v178 = vunpack.c.l.b16 %v94
    %v179 = vunpack.c.h.b16 %v94
    %v180 = vunpack.c.l.b16 %v95
    %v181 = vunpack.c.h.b16 %v95
    %v182 = vunpack.c.l.b16 %v96
    %v183 = vunpack.c.h.b16 %v96
    %v184 = vunpack.c.l.b16 %v97
    %v185 = vunpack.c.h.b16 %v97
    %v186 = vunpack.c.l.b16 %v98
    %v187 = vunpack.c.h.b16 %v98
    %v188 = vunpack.c.l.b16 %v99
    %v189 = vunpack.c.h.b16 %v99
    %v190 = vunpack.c.l.b16 %v100
    %v191 = vunpack.c.h.b16 %v100
    %v192 = vunpack.c.l.b16 %v101
    %v193 = vunpack.c.h.b16 %v101
    %v194 = vunpack.c.l.b16 %v102
    %v195 = vunpack.c.h.b16 %v102
    %v196 = vunpack.c.l.b16 %v103
    %v197 = vunpack.c.h.b16 %v103
    %v198 = vunpack.c.l.b16 %v104
    %v199 = vunpack.c.h.b16 %v104
    %v200 = vunpack.c.l.b16 %v105
    %v201 = vunpack.c.h.b16 %v105
    %v202 = vpack.c.b16 %v142, %v138
    %v203 = vpack.c.b16 %v143, %v139
    %v204 = vpack.c.b16 %v144, %v140
    %v205 = vpack.c.b16 %v145, %v141
    %v206 = vpack.c.b16 %v150, %v146
    %v207 = vpack.c.b16 %v151, %v147
    %v208 = vpack.c.b16 %v152, %v148
    %v209 = vpack.c.b16 %v153, %v149
    %v210 = vpack.c.b16 %v158, %v154
    %v211 = vpack.c.b16 %v159, %v155
    %v212 = vpack.c.b16 %v160, %v156
    %v213 = vpack.c.b16 %v161, %v157
    %v214 = vpack.c.b16 %v166, %v162
    %v215 = vpack.c.b16 %v167, %v163
    %v216 = vpack.c.b16 %v168, %v164
    %v217 = vpack.c.b16 %v169, %v165
    %v218 = vpack.c.b16 %v174, %v170
    %v219 = vpack.c.b16 %v175, %v171
    %v220 = vpack.c.b16 %v176, %v172
    %v221 = vpack.c.b16 %v177, %v173
    %v222 = vpack.c.b16 %v182, %v178
    %v223 = vpack.c.b16 %v183, %v179
    %v224 = vpack.c.b16 %v184, %v180
    %v225 = vpack.c.b16 %v185, %v181
    %v226 = vpack.c.b16 %v190, %v186
    %v227 = vpack.c.b16 %v191, %v187
    %v228 = vpack.c.b16 %v192, %v188
    %v229 = vpack.c.b16 %v193, %v189
    %v230 = vpack.c.b16 %v198, %v194
    %v231 = vpack.c.b16 %v199, %v195
    %v232 = vpack.c.b16 %v200, %v196
    %v233 = vpack.c.b16 %v201, %v197
    %266 = vmatprep.subr.bf16.mxu0 %v203
    %267 = vmatpush1.bf16.msra.mxu0 %v202
    %268 = vmatprep.subr.bf16.mxu0 %v207
    %269 = vmatpush1.bf16.msra.mxu0 %v206
    %270 = vmatprep.subr.bf16.mxu0 %v211
    %271 = vmatpush1.bf16.msra.mxu0 %v210
    %272 = vmatprep.subr.bf16.mxu0 %v215
    %273 = vmatpush1.bf16.msra.mxu0 %v214
    %274 = vmatprep.subr.bf16.mxu0 %v219
    %275 = vmatpush1.bf16.msra.mxu0 %v218
    %276 = vmatprep.subr.bf16.mxu0 %v223
    %277 = vmatpush1.bf16.msra.mxu0 %v222
    %278 = vmatprep.subr.bf16.mxu0 %v227
    %279 = vmatpush1.bf16.msra.mxu0 %v226
    %280 = vmatprep.subr.bf16.mxu0 %v231
    %281 = vmatpush1.bf16.msra.mxu0 %v230
    %282 = vmatprep.subr.bf16.mxu0 0
    %283 = vmatpush1.bf16.msra.mxu0 0
    %284 = vmatprep.subr.bf16.mxu0 0
    %285 = vmatpush1.bf16.msra.mxu0 0
    %286 = vmatprep.subr.bf16.mxu0 0
    %287 = vmatpush1.bf16.msra.mxu0 0
    %288 = vmatprep.subr.bf16.mxu0 0
    %289 = vmatpush1.bf16.msra.mxu0 0
    %290 = vmatprep.subr.bf16.mxu0 0
    %291 = vmatpush1.bf16.msra.mxu0 0
    %292 = vmatprep.subr.bf16.mxu0 0
    %293 = vmatpush1.bf16.msra.mxu0 0
    %294 = vmatprep.subr.bf16.mxu0 0
    %295 = vmatpush1.bf16.msra.mxu0 0
    %296 = vmatprep.subr.bf16.mxu0 0
    %297 = vmatpush1.bf16.msra.mxu0 0
    %298 = vmatprep.mubr.bf16.mxu0 0
    %299 = vmatmul.mubr.bf16.gmra.mrb[0].mxu0 %v73
    %v300 = vpop.f32.mrb[0].mxu0
    %v301 = vadd.f32 0.0, %v300
    %v302 = vpop.f32.mrb[0].mxu0
    %v303 = vadd.f32 0.0, %v302
    %v304 = vpop.f32.mrb[0].mxu0
    %v305 = vpop.f32.mrb[0].mxu0
    %306 = vdwg.mxu0
    %307 = vmatprep.subr.bf16.mxu0 %v205
    %308 = vmatpush1.bf16.msra.mxu0 %v204
    %309 = vmatprep.subr.bf16.mxu0 %v209
    %310 = vmatpush1.bf16.msra.mxu0 %v208
    %311 = vmatprep.subr.bf16.mxu0 %v213
    %312 = vmatpush1.bf16.msra.mxu0 %v212
    %313 = vmatprep.subr.bf16.mxu0 %v217
    %314 = vmatpush1.bf16.msra.mxu0 %v216
    %315 = vmatprep.subr.bf16.mxu0 %v221
    %316 = vmatpush1.bf16.msra.mxu0 %v220
    %317 = vmatprep.subr.bf16.mxu0 %v225
    %318 = vmatpush1.bf16.msra.mxu0 %v224
    %319 = vmatprep.subr.bf16.mxu0 %v229
    %320 = vmatpush1.bf16.msra.mxu0 %v228
    %321 = vmatprep.subr.bf16.mxu0 %v233
    %322 = vmatpush1.bf16.msra.mxu0 %v232
    %323 = vmatprep.subr.bf16.mxu0 0
    %324 = vmatpush1.bf16.msra.mxu0 0
    %325 = vmatprep.subr.bf16.mxu0 0
    %326 = vmatpush1.bf16.msra.mxu0 0
    %327 = vmatprep.subr.bf16.mxu0 0
    %328 = vmatpush1.bf16.msra.mxu0 0
    %329 = vmatprep.subr.bf16.mxu0 0
    %330 = vmatpush1.bf16.msra.mxu0 0
    %331 = vmatprep.subr.bf16.mxu0 0
    %332 = vmatpush1.bf16.msra.mxu0 0
    %333 = vmatprep.subr.bf16.mxu0 0
    %334 = vmatpush1.bf16.msra.mxu0 0
    %335 = vmatprep.subr.bf16.mxu0 0
    %336 = vmatpush1.bf16.msra.mxu0 0
    %337 = vmatprep.subr.bf16.mxu0 0
    %338 = vmatpush1.bf16.msra.mxu0 0
    %339 = vmatprep.mubr.bf16.mxu0 0
    %340 = vmatmul.mubr.bf16.gmra.mrb[0].mxu0 %v73
    %v341 = vpop.f32.mrb[0].mxu0
    %v342 = vadd.f32 0.0, %v341
    %v343 = vpop.f32.mrb[0].mxu0
    %v344 = vadd.f32 0.0, %v343
    %v345 = vpop.f32.mrb[0].mxu0
    %v346 = vpop.f32.mrb[0].mxu0
    %347 = vdwg.mxu0
    %v348 = vadd.f32 %v69, %v301
    %v349 = vadd.f32 %v70, %v303
    %v350 = vadd.f32 %v71, %v342
    %v351 = vadd.f32 %v72, %v344
    %352 = vst [vmem:[#allocation2] sm:$0xff] %v348
    %353 = vst [vmem:[#allocation2 + $0x8] sm:$0xff] %v349
    %354 = vst [vmem:[#allocation2 + $0x10] sm:$0xff] %v350
    %355 = vst [vmem:[#allocation2 + $0x18] sm:$0xff] %v351
    // Predicated region
    $region38: #{tpu_custom_call.1} parent=1 // pred_check
      %p356 = pneg %p61
    $region39: #{tpu_custom_call.1} parent=1 // pred_check_branch
      %358 = sbr.rel (%p356) target = $region41
    $region40: #{tpu_custom_call.1} parent=1 // pred_region
      %v359 = vld [vmem:[#allocation2] sm:$0xff]
      %v360 = vld [vmem:[#allocation2 + $0x8] sm:$0xff]
      %v361 = vld [vmem:[#allocation2 + $0x10] sm:$0xff]
      %v362 = vld [vmem:[#allocation2 + $0x18] sm:$0xff]
      %v363 = vld [vmem:[%s2] sm:$0xf]
      %v365 = vlaneseq
      %v366 = vshrl.u32 %v365, 7
      %v367 = vsub.s32 0, %v366
      %v368 = vrot.slane %v363, %v367
      %v369 = vlaneseq
      %v370 = vshrl.u32 %v369, 7
      %v371 = vsub.s32 1, %v370
      %v372 = vrot.slane %v363, %v371
      %v373 = vlaneseq
      %v374 = vshrl.u32 %v373, 7
      %v375 = vsub.s32 2, %v374
      %v376 = vrot.slane %v363, %v375
      %v377 = vlaneseq
      %v378 = vshrl.u32 %v377, 7
      %v379 = vsub.s32 3, %v378
      %v380 = vrot.slane %v363, %v379
      %v385 = vadd.f32 %v359, %v368
      %v386 = vadd.f32 %v360, %v372
      %v387 = vadd.f32 %v361, %v376
      %v388 = vadd.f32 %v362, %v380
      %v389 = vmax.f32 %v385, 0.0
      %v390 = vmax.f32 %v386, 0.0
      %v391 = vmax.f32 %v387, 0.0
      %v392 = vmax.f32 %v388, 0.0
      %v393 = vpack.c.bf16 %v389, %v389
      %v394 = vpack.c.bf16 %v390, %v390
      %v395 = vpack.c.bf16 %v391, %v391
      %v396 = vpack.c.bf16 %v392, %v392
      %v397 = vld [vmem:[#allocation8] sm:$0xf]
      %v398 = vld [vmem:[#allocation8 + $0x4] sm:$0xf]
      %v399 = vld [vmem:[#allocation8 + $0x8] sm:$0xf]
      %v400 = vld [vmem:[#allocation8 + $0xc] sm:$0xf]
      %v401 = vld [vmem:[#allocation8 + $0x10] sm:$0xf]
      %v402 = vld [vmem:[#allocation8 + $0x14] sm:$0xf]
      %v403 = vld [vmem:[#allocation8 + $0x18] sm:$0xf]
      %v404 = vld [vmem:[#allocation8 + $0x1c] sm:$0xf]
      %v405 = vld [vmem:[#allocation8 + $0x20] sm:$0xf]
      %v406 = vld [vmem:[#allocation8 + $0x24] sm:$0xf]
      %v407 = vld [vmem:[#allocation8 + $0x28] sm:$0xf]
      %v408 = vld [vmem:[#allocation8 + $0x2c] sm:$0xf]
      %v409 = vld [vmem:[#allocation8 + $0x30] sm:$0xf]
      %v410 = vld [vmem:[#allocation8 + $0x34] sm:$0xf]
      %v411 = vld [vmem:[#allocation8 + $0x38] sm:$0xf]
      %v412 = vld [vmem:[#allocation8 + $0x3c] sm:$0xf]
      %v413 = vld [vmem:[#allocation8 + $0x40] sm:$0xf]
      %v414 = vld [vmem:[#allocation8 + $0x44] sm:$0xf]
      %v415 = vld [vmem:[#allocation8 + $0x48] sm:$0xf]
      %v416 = vld [vmem:[#allocation8 + $0x4c] sm:$0xf]
      %v417 = vld [vmem:[#allocation8 + $0x50] sm:$0xf]
      %v418 = vld [vmem:[#allocation8 + $0x54] sm:$0xf]
      %v419 = vld [vmem:[#allocation8 + $0x58] sm:$0xf]
      %v420 = vld [vmem:[#allocation8 + $0x5c] sm:$0xf]
      %v421 = vld [vmem:[#allocation8 + $0x60] sm:$0xf]
      %v422 = vld [vmem:[#allocation8 + $0x64] sm:$0xf]
      %v423 = vld [vmem:[#allocation8 + $0x68] sm:$0xf]
      %v424 = vld [vmem:[#allocation8 + $0x6c] sm:$0xf]
      %v425 = vld [vmem:[#allocation8 + $0x70] sm:$0xf]
      %v426 = vld [vmem:[#allocation8 + $0x74] sm:$0xf]
      %v427 = vld [vmem:[#allocation8 + $0x78] sm:$0xf]
      %v428 = vld [vmem:[#allocation8 + $0x7c] sm:$0xf]
      %v429 = vld [vmem:[#allocation8 + $0x80] sm:$0xf]
      %v430 = vld [vmem:[#allocation8 + $0x84] sm:$0xf]
      %v431 = vld [vmem:[#allocation8 + $0x88] sm:$0xf]
      %v432 = vld [vmem:[#allocation8 + $0x8c] sm:$0xf]
      %v433 = vld [vmem:[#allocation8 + $0x90] sm:$0xf]
      %v434 = vld [vmem:[#allocation8 + $0x94] sm:$0xf]
      %v435 = vld [vmem:[#allocation8 + $0x98] sm:$0xf]
      %v436 = vld [vmem:[#allocation8 + $0x9c] sm:$0xf]
      %v437 = vld [vmem:[#allocation8 + $0xa0] sm:$0xf]
      %v438 = vld [vmem:[#allocation8 + $0xa4] sm:$0xf]
      %v439 = vld [vmem:[#allocation8 + $0xa8] sm:$0xf]
      %v440 = vld [vmem:[#allocation8 + $0xac] sm:$0xf]
      %v441 = vld [vmem:[#allocation8 + $0xb0] sm:$0xf]
      %v442 = vld [vmem:[#allocation8 + $0xb4] sm:$0xf]
      %v443 = vld [vmem:[#allocation8 + $0xb8] sm:$0xf]
      %v444 = vld [vmem:[#allocation8 + $0xbc] sm:$0xf]
      %v445 = vld [vmem:[#allocation8 + $0xc0] sm:$0xf]
      %v446 = vld [vmem:[#allocation8 + $0xc4] sm:$0xf]
      %v447 = vld [vmem:[#allocation8 + $0xc8] sm:$0xf]
      %v448 = vld [vmem:[#allocation8 + $0xcc] sm:$0xf]
      %v449 = vld [vmem:[#allocation8 + $0xd0] sm:$0xf]
      %v450 = vld [vmem:[#allocation8 + $0xd4] sm:$0xf]
      %v451 = vld [vmem:[#allocation8 + $0xd8] sm:$0xf]
      %v452 = vld [vmem:[#allocation8 + $0xdc] sm:$0xf]
      %v453 = vld [vmem:[#allocation8 + $0xe0] sm:$0xf]
      %v454 = vld [vmem:[#allocation8 + $0xe4] sm:$0xf]
      %v455 = vld [vmem:[#allocation8 + $0xe8] sm:$0xf]
      %v456 = vld [vmem:[#allocation8 + $0xec] sm:$0xf]
      %v457 = vld [vmem:[#allocation8 + $0xf0] sm:$0xf]
      %v458 = vld [vmem:[#allocation8 + $0xf4] sm:$0xf]
      %v459 = vld [vmem:[#allocation8 + $0xf8] sm:$0xf]
      %v460 = vld [vmem:[#allocation8 + $0xfc] sm:$0xf]
      %v461 = vld [vmem:[%s4] sm:$0x1]
      %v463 = vlaneseq
      %v464 = vshrl.u32 %v463, 7
      %v465 = vsub.s32 0, %v464
      %v466 = vrot.slane %v461, %v465
      %v532 = vunpack.c.l.b16 %v397
      %v533 = vunpack.c.l.b16 %v398
      %v534 = vunpack.c.l.b16 %v399
      %v535 = vunpack.c.l.b16 %v400
      %v536 = vunpack.c.l.b16 %v401
      %v537 = vunpack.c.l.b16 %v402
      %v538 = vunpack.c.l.b16 %v403
      %v539 = vunpack.c.l.b16 %v404
      %v540 = vunpack.c.l.b16 %v405
      %v541 = vunpack.c.l.b16 %v406
      %v542 = vunpack.c.l.b16 %v407
      %v543 = vunpack.c.l.b16 %v408
      %v544 = vunpack.c.l.b16 %v409
      %v545 = vunpack.c.l.b16 %v410
      %v546 = vunpack.c.l.b16 %v411
      %v547 = vunpack.c.l.b16 %v412
      %v548 = vunpack.c.l.b16 %v413
      %v549 = vunpack.c.l.b16 %v414
      %v550 = vunpack.c.l.b16 %v415
      %v551 = vunpack.c.l.b16 %v416
      %v552 = vunpack.c.l.b16 %v417
      %v553 = vunpack.c.l.b16 %v418
      %v554 = vunpack.c.l.b16 %v419
      %v555 = vunpack.c.l.b16 %v420
      %v556 = vunpack.c.l.b16 %v421
      %v557 = vunpack.c.l.b16 %v422
      %v558 = vunpack.c.l.b16 %v423
      %v559 = vunpack.c.l.b16 %v424
      %v560 = vunpack.c.l.b16 %v425
      %v561 = vunpack.c.l.b16 %v426
      %v562 = vunpack.c.l.b16 %v427
      %v563 = vunpack.c.l.b16 %v428
      %v564 = vunpack.c.l.b16 %v429
      %v565 = vunpack.c.l.b16 %v430
      %v566 = vunpack.c.l.b16 %v431
      %v567 = vunpack.c.l.b16 %v432
      %v568 = vunpack.c.l.b16 %v433
      %v569 = vunpack.c.l.b16 %v434
      %v570 = vunpack.c.l.b16 %v435
      %v571 = vunpack.c.l.b16 %v436
      %v572 = vunpack.c.l.b16 %v437
      %v573 = vunpack.c.l.b16 %v438
      %v574 = vunpack.c.l.b16 %v439
      %v575 = vunpack.c.l.b16 %v440
      %v576 = vunpack.c.l.b16 %v441
      %v577 = vunpack.c.l.b16 %v442
      %v578 = vunpack.c.l.b16 %v443
      %v579 = vunpack.c.l.b16 %v444
      %v580 = vunpack.c.l.b16 %v445
      %v581 = vunpack.c.l.b16 %v446
      %v582 = vunpack.c.l.b16 %v447
      %v583 = vunpack.c.l.b16 %v448
      %v584 = vunpack.c.l.b16 %v449
      %v585 = vunpack.c.l.b16 %v450
      %v586 = vunpack.c.l.b16 %v451
      %v587 = vunpack.c.l.b16 %v452
      %v588 = vunpack.c.l.b16 %v453
      %v589 = vunpack.c.l.b16 %v454
      %v590 = vunpack.c.l.b16 %v455
      %v591 = vunpack.c.l.b16 %v456
      %v592 = vunpack.c.l.b16 %v457
      %v593 = vunpack.c.l.b16 %v458
      %v594 = vunpack.c.l.b16 %v459
      %v595 = vunpack.c.l.b16 %v460
      %v596 = vpack.c.b16 %v533, %v532
      %v597 = vpack.c.b16 %v535, %v534
      %v598 = vpack.c.b16 %v537, %v536
      %v599 = vpack.c.b16 %v539, %v538
      %v600 = vpack.c.b16 %v541, %v540
      %v601 = vpack.c.b16 %v543, %v542
      %v602 = vpack.c.b16 %v545, %v544
      %v603 = vpack.c.b16 %v547, %v546
      %v604 = vpack.c.b16 %v549, %v548
      %v605 = vpack.c.b16 %v551, %v550
      %v606 = vpack.c.b16 %v553, %v552
      %v607 = vpack.c.b16 %v555, %v554
      %v608 = vpack.c.b16 %v557, %v556
      %v609 = vpack.c.b16 %v559, %v558
      %v610 = vpack.c.b16 %v561, %v560
      %v611 = vpack.c.b16 %v563, %v562
      %v612 = vpack.c.b16 %v565, %v564
      %v613 = vpack.c.b16 %v567, %v566
      %v614 = vpack.c.b16 %v569, %v568
      %v615 = vpack.c.b16 %v571, %v570
      %v616 = vpack.c.b16 %v573, %v572
      %v617 = vpack.c.b16 %v575, %v574
      %v618 = vpack.c.b16 %v577, %v576
      %v619 = vpack.c.b16 %v579, %v578
      %v620 = vpack.c.b16 %v581, %v580
      %v621 = vpack.c.b16 %v583, %v582
      %v622 = vpack.c.b16 %v585, %v584
      %v623 = vpack.c.b16 %v587, %v586
      %v624 = vpack.c.b16 %v589, %v588
      %v625 = vpack.c.b16 %v591, %v590
      %v626 = vpack.c.b16 %v593, %v592
      %v627 = vpack.c.b16 %v595, %v594
      %660 = vmatprep.subr.bf16.mxu0 0
      %661 = vmatpush1.bf16.msra.mxu0 %v596
      %662 = vmatprep.subr.bf16.mxu0 0
      %663 = vmatpush1.bf16.msra.mxu0 %v597
      %664 = vmatprep.subr.bf16.mxu0 0
      %665 = vmatpush1.bf16.msra.mxu0 %v598
      %666 = vmatprep.subr.bf16.mxu0 0
      %667 = vmatpush1.bf16.msra.mxu0 %v599
      %668 = vmatprep.subr.bf16.mxu0 0
      %669 = vmatpush1.bf16.msra.mxu0 %v600
      %670 = vmatprep.subr.bf16.mxu0 0
      %671 = vmatpush1.bf16.msra.mxu0 %v601
      %672 = vmatprep.subr.bf16.mxu0 0
      %673 = vmatpush1.bf16.msra.mxu0 %v602
      %674 = vmatprep.subr.bf16.mxu0 0
      %675 = vmatpush1.bf16.msra.mxu0 %v603
      %676 = vmatprep.subr.bf16.mxu0 0
      %677 = vmatpush1.bf16.msra.mxu0 %v604
      %678 = vmatprep.subr.bf16.mxu0 0
      %679 = vmatpush1.bf16.msra.mxu0 %v605
      %680 = vmatprep.subr.bf16.mxu0 0
      %681 = vmatpush1.bf16.msra.mxu0 %v606
      %682 = vmatprep.subr.bf16.mxu0 0
      %683 = vmatpush1.bf16.msra.mxu0 %v607
      %684 = vmatprep.subr.bf16.mxu0 0
      %685 = vmatpush1.bf16.msra.mxu0 %v608
      %686 = vmatprep.subr.bf16.mxu0 0
      %687 = vmatpush1.bf16.msra.mxu0 %v609
      %688 = vmatprep.subr.bf16.mxu0 0
      %689 = vmatpush1.bf16.msra.mxu0 %v610
      %690 = vmatprep.subr.bf16.mxu0 0
      %691 = vmatpush1.bf16.msra.mxu0 %v611
      %692 = vmatprep.mubr.bf16.mxu0 %v394
      %693 = vmatmul.mubr.bf16.gmra.mrb[0].mxu0 %v393
      %v694 = vpop.f32.mrb[0].mxu0
      %v695 = vadd.f32 %v466, %v694
      %v696 = vpop.f32.mrb[0].mxu0
      %v697 = vpop.f32.mrb[0].mxu0
      %v698 = vpop.f32.mrb[0].mxu0
      %699 = vdwg.mxu0
      %700 = vmatprep.subr.bf16.mxu0 0
      %701 = vmatpush1.bf16.msra.mxu0 %v612
      %702 = vmatprep.subr.bf16.mxu0 0
      %703 = vmatpush1.bf16.msra.mxu0 %v613
      %704 = vmatprep.subr.bf16.mxu0 0
      %705 = vmatpush1.bf16.msra.mxu0 %v614
      %706 = vmatprep.subr.bf16.mxu0 0
      %707 = vmatpush1.bf16.msra.mxu0 %v615
      %708 = vmatprep.subr.bf16.mxu0 0
      %709 = vmatpush1.bf16.msra.mxu0 %v616
      %710 = vmatprep.subr.bf16.mxu0 0
      %711 = vmatpush1.bf16.msra.mxu0 %v617
      %712 = vmatprep.subr.bf16.mxu0 0
      %713 = vmatpush1.bf16.msra.mxu0 %v618
      %714 = vmatprep.subr.bf16.mxu0 0
      %715 = vmatpush1.bf16.msra.mxu0 %v619
      %716 = vmatprep.subr.bf16.mxu0 0
      %717 = vmatpush1.bf16.msra.mxu0 %v620
      %718 = vmatprep.subr.bf16.mxu0 0
      %719 = vmatpush1.bf16.msra.mxu0 %v621
      %720 = vmatprep.subr.bf16.mxu0 0
      %721 = vmatpush1.bf16.msra.mxu0 %v622
      %722 = vmatprep.subr.bf16.mxu0 0
      %723 = vmatpush1.bf16.msra.mxu0 %v623
      %724 = vmatprep.subr.bf16.mxu0 0
      %725 = vmatpush1.bf16.msra.mxu0 %v624
      %726 = vmatprep.subr.bf16.mxu0 0
      %727 = vmatpush1.bf16.msra.mxu0 %v625
      %728 = vmatprep.subr.bf16.mxu0 0
      %729 = vmatpush1.bf16.msra.mxu0 %v626
      %730 = vmatprep.subr.bf16.mxu0 0
      %731 = vmatpush1.bf16.msra.mxu0 %v627
      %732 = vmatprep.mubr.bf16.mxu0 %v396
      %733 = vmatmul.mubr.bf16.gmra.mrb[0].mxu0 %v395
      %v734 = vpop.f32.mrb[0].mxu0
      %v735 = vadd.f32 %v695, %v734
      %v736 = vpop.f32.mrb[0].mxu0
      %v737 = vpop.f32.mrb[0].mxu0
      %v738 = vpop.f32.mrb[0].mxu0
      %739 = vdwg.mxu0
      %740 = vst [vmem:[#allocation9] sm:$0xff] %v735
    $region41: #{tpu_custom_call.1} parent=1 // pred_fallthru
      _
    // Predicated region
    $region42: #{tpu_custom_call.1} parent=1 // pred_check
      _
    $region43: #{tpu_custom_call.1} parent=1 // pred_check_branch
      %742 = sbr.rel (0) target = $region45
    $region44: #{tpu_custom_call.1} parent=1 // pred_region
      %s744 = ssub.s32 128, 128
      %745 = vsyncadd [#allocation5], %s744
      %s747 = sshll.u32 [#allocation9], 4
      %s748 = int_to_ptr.vmem [resolvable:$true] %s747
      %750 = dma.vmem_to_hbm [thread:$0]  %s748, 128, %s5, [#allocation5]
    $region45: #{tpu_custom_call.1} parent=1 // pred_fallthru
      _
    // Predicated region
    $region46: #{tpu_custom_call.1} parent=1 // pred_check
      _
    $region47: #{tpu_custom_call.1} parent=1 // pred_check_branch
      %752 = sbr.rel (0) target = $region49
    $region48: #{tpu_custom_call.1} parent=1 // pred_region
      %753 = dma.done [#allocation5], 128
    $region49: #{tpu_custom_call.1} parent=1 // pred_fallthru
      _
    %754 = vsyncpa [#allocation4], 1
    %755 = vsyncpa [#allocation7], 1
    %756 = vsyncpa [#allocation5], 1

</llo_original>
